<compile_context>
chip_gen: v6e
topology: v6e:2x2x1
jax: 0.10.0
libtpu: 0.0.40
codegen_flags: <defaults>
</compile_context>

<pallas_src>
import functools
import math

import jax
import jax.numpy as jnp
import numpy as np
from jax.experimental import pallas as pl
from jax.experimental.pallas import tpu as pltpu


def _round_up(x, m):
    return ((x + m - 1) // m) * m


def _vmem_limit_bytes():
    # Leave ~25% headroom for compiler scratch / semaphores.
    try:
        cap = pltpu.get_tpu_info().vmem_capacity_bytes
        return int(cap - cap // 4)
    except Exception:
        return 48 * 1024 * 1024  # safe for v7x's 64 MiB per-TensorCore VMEM


# ----------------------------------------------------------------------------
# Pallas kernel: one (tm, tn) tile of the pairwise-distance matrix.
# ----------------------------------------------------------------------------
def _contrastive_tile_kernel(e_row_ref, e_col_ref, col_nrm_ref,
                             row_lab_ref, col_lab_ref, out_ref,
                             *, margin, tm, tn, valid_n):
    i = pl.program_id(0)
    j = pl.program_id(1)

    # Tiles strictly below the block diagonal hold no (row < col) pairs.
    has_work = (i * tm) < ((j + 1) * tn)

    @pl.when(has_work)
    def _compute():
        er = e_row_ref[...]                      # (tm, d_pad) bf16
        ec = e_col_ref[...]                      # (tn, d_pad) bf16

        # Gram tile on the MXU: bf16 x bf16 -> f32 accumulation.
        g = jax.lax.dot_general(
            er, ec, dimension_numbers=(((1,), (1,)), ((), ())),
            preferred_element_type=jnp.float32)  # (tm, tn)

        # Row norms recomputed in-kernel in f32 (VPU/XLU have slack here);
        # column norms arrive lane-dense and precomputed in f32.
        er32 = er.astype(jnp.float32)
        row_nrm = jnp.sum(er32 * er32, axis=1, keepdims=True)      # (tm, 1)
        d2 = jnp.maximum(row_nrm + col_nrm_ref[...] - 2.0 * g, 0.0)

        # Pair masks from labels + global indices (no mask arrays in HBM).
        row_ids = i * tm + jax.lax.broadcasted_iota(jnp.int32, (tm, tn), 0)
        col_ids = j * tn + jax.lax.broadcasted_iota(jnp.int32, (tm, tn), 1)
        # row < col implies row < valid_n, so one bound check suffices.
        upper = (row_ids < col_ids) & (col_ids < valid_n)
        same = row_lab_ref[...] == col_lab_ref[...]                # (tm, tn)

        # positive_loss = dist^2 ; negative_loss = relu(margin - dist)^2
        pos_part = jnp.where(upper & same, d2, 0.0)
        hinge = jnp.maximum(margin - jnp.sqrt(d2), 0.0)
        neg_part = jnp.where(upper & jnp.logical_not(same), hinge * hinge, 0.0)

        tile_sum = jnp.sum(pos_part + neg_part)
        # Lane-dense (8,128) output block: broadcast the per-tile partial sum.
        out_ref[...] = jnp.full((8, 128), tile_sum, jnp.float32)

    @pl.when(jnp.logical_not(has_work))
    def _skip():
        out_ref[...] = jnp.zeros((8, 128), jnp.float32)


# ----------------------------------------------------------------------------
# Wrapper: padding, tiling, final mean.
# ----------------------------------------------------------------------------
def online_contrastive_loss(embeddings, labels, margin, *,
                            block_m=None, block_n=None):
    """OnlineContrastiveLoss forward with the all-pairs selector.

    embeddings: (B, D) float array; labels: (B,) int array; returns f32 scalar.
    """
    embeddings = jnp.asarray(embeddings)
    labels = jnp.asarray(labels).astype(jnp.int32)
    b, d = (int(s) for s in embeddings.shape)
    total_pairs = b * (b - 1) // 2
    if total_pairs == 0:
        return jnp.float32(jnp.nan)   # torch.mean of an empty tensor is NaN

    b_pad8 = _round_up(b, 8)
    if block_m is None:
        block_m = min(b_pad8, 512)    # multiple-of-256 tiles for large B (MXU native)
    if block_n is None:
        block_n = b_pad8 if b_pad8 <= 512 else 512
    tm, tn = int(block_m), int(block_n)
    if tm % 8 != 0:
        raise ValueError("block_m must be a multiple of 8")
    b_pad = _round_up(b_pad8, math.lcm(tm, tn))
    if tn % 128 != 0 and tn != b_pad:
        raise ValueError("block_n must be a multiple of 128 or cover the padded batch")
    d_pad = _round_up(d, 128)
    nr, nc = b_pad // tm, b_pad // tn

    # Pad once in f32; norms in f32 (Gram-form cancellation stays tolerable),
    # embeddings to bf16 for the MXU (halves E's HBM traffic + VMEM footprint).
    e32 = jnp.pad(embeddings.astype(jnp.float32),
                  ((0, b_pad - b), (0, d_pad - d)))
    col_nrm = jnp.sum(e32 * e32, axis=1).reshape(1, b_pad)
    e_bf16 = e32.astype(jnp.bfloat16)

    lab_pad = jnp.pad(labels, (0, b_pad - b), constant_values=-1)
    row_lab = lab_pad.reshape(b_pad, 1)
    col_lab = lab_pad.reshape(1, b_pad)

    kernel = functools.partial(_contrastive_tile_kernel,
                               margin=float(margin), tm=tm, tn=tn, valid_n=b)

    partials = pl.pallas_call(
        kernel,
        out_shape=jax.ShapeDtypeStruct((nr * 8, nc * 128), jnp.float32),
        grid=(nr, nc),
        in_specs=[
            pl.BlockSpec((tm, d_pad), lambda i, j: (i, 0)),   # row tile of E (bf16)
            pl.BlockSpec((tn, d_pad), lambda i, j: (j, 0)),   # column tile of E (bf16)
            pl.BlockSpec((1, tn),     lambda i, j: (0, j)),   # ||e_j||^2, f32 lane-dense
            pl.BlockSpec((tm, 1),     lambda i, j: (i, 0)),   # labels of row tile
            pl.BlockSpec((1, tn),     lambda i, j: (0, j)),   # labels of column tile
        ],
        out_specs=pl.BlockSpec((8, 128), lambda i, j: (i, j)),
        compiler_params=pltpu.CompilerParams(
            dimension_semantics=("parallel", "parallel"),
            vmem_limit_bytes=_vmem_limit_bytes()),
    )(e_bf16, e_bf16, col_nrm, row_lab, col_lab)

    # Every element of output block (i, j) equals that tile's partial sum.
    tile_sums = partials[0::8, 0::128]
    return jnp.sum(tile_sums) / jnp.float32(total_pairs)


# ----------------------------------------------------------------------------
# Pure-JAX reference mirroring the PyTorch forward (vectorized, no B^2 loop).
# ----------------------------------------------------------------------------
def reference_loss(embeddings, labels, margin):
    e = jnp.asarray(embeddings, dtype=jnp.float32)
    b = e.shape[0]
    d2 = jnp.sum((e[:, None, :] - e[None, :, :]) ** 2, axis=-1)
    idx = jnp.arange(b)
    upper = idx[:, None] < idx[None, :]
    same = labels[:, None] == labels[None, :]
    pos = jnp.where(upper & same, d2, 0.0)
    hinge = jnp.maximum(margin - jnp.sqrt(d2), 0.0)
    neg = jnp.where(upper & jnp.logical_not(same), hinge * hinge, 0.0)
    total = b * (b - 1) // 2
    return (jnp.sum(pos) + jnp.sum(neg)) / jnp.float32(total)


if __name__ == "__main__":
    key = jax.random.PRNGKey(0)
    margin = 10.0   # dist ~ sqrt(2*D); this margin exercises active + clipped hinges

    checks = []

    # Case 1: B=20, D=40 -> row padding (20->24) and feature padding (40->128).
    k1, k2 = jax.random.split(key)
    emb1 = jax.random.normal(k1, (20, 40), dtype=jnp.float32)
    lab1 = jnp.asarray(np.arange(20) % 5, dtype=jnp.int32)
    ref1 = reference_loss(emb1, lab1, margin)
    checks.append(("b20_single_tile",
                   online_contrastive_loss(emb1, lab1, margin), ref1))
    checks.append(("b20_row_tiled",
                   online_contrastive_loss(emb1, lab1, margin, block_m=8), ref1))

    # Case 2: B=250, D=64 -> padded to 256, 2x2 grid of 128-wide tiles
    # (exercises the column-streaming path and the below-diagonal skip).
    emb2 = jax.random.normal(k2, (250, 64), dtype=jnp.float32)
    lab2 = jnp.asarray(np.arange(250) % 7, dtype=jnp.int32)
    ref2 = reference_loss(emb2, lab2, margin)
    checks.append(("b250_2d_grid",
                   online_contrastive_loss(emb2, lab2, margin,
                                           block_m=128, block_n=128), ref2))

    for name, got, want in checks:
        got = np.asarray(jax.block_until_ready(got))
        want = np.asarray(jax.block_until_ready(want))
        # bf16 Gram-form distances vs f32 difference-form reference.
        if not np.allclose(got, want, rtol=2e-2, atol=2e-2):
            raise AssertionError(f"{name}: pallas={got} ref={want}")
    print("KERNEL_OK")
</pallas_src>

<mosaic_0001>
module attributes {stable_mosaic.version = 11 : i64} {
  func.func @_contrastive_tile_kernel(%arg0: i32, %arg1: i32, %arg2: memref<24x128xbf16, #tpu.memory_space<vmem>>, %arg3: memref<24x128xbf16, #tpu.memory_space<vmem>>, %arg4: memref<1x24xf32, #tpu.memory_space<vmem>>, %arg5: memref<24x1xi32, #tpu.memory_space<vmem>>, %arg6: memref<1x24xi32, #tpu.memory_space<vmem>>, %arg7: memref<8x128xf32, #tpu.memory_space<vmem>>) attributes {dimension_semantics = [#tpu.dimension_semantics<parallel>, #tpu.dimension_semantics<parallel>], iteration_bounds = array<i64: 1, 1>, scalar_prefetch = 0 : i64, scratch_operands = 0 : i64, tpu.core_type = #tpu.core_type<tc>, window_params = [{transform_indices = @transform_0, window_bounds = array<i64: 24, 128>}, {transform_indices = @transform_1, window_bounds = array<i64: 24, 128>}, {transform_indices = @transform_2, window_bounds = array<i64: 1, 24>}, {transform_indices = @transform_3, window_bounds = array<i64: 24, 1>}, {transform_indices = @transform_4, window_bounds = array<i64: 1, 24>}, {transform_indices = @transform_5, window_bounds = array<i64: 8, 128>}]} {
    %c24_i32 = arith.constant 24 : i32
    %0 = arith.muli %arg0, %c24_i32 : i32
    %c1_i32 = arith.constant 1 : i32
    %1 = arith.addi %arg1, %c1_i32 : i32
    %c24_i32_0 = arith.constant 24 : i32
    %2 = arith.muli %1, %c24_i32_0 : i32
    %3 = arith.cmpi slt, %0, %2 : i32
    %4 = arith.extui %3 : i1 to i32
    %c0_i32 = arith.constant 0 : i32
    %5 = arith.cmpi ne, %4, %c0_i32 : i32
    scf.if %5 {
      %c0 = arith.constant 0 : index
      %c0_2 = arith.constant 0 : index
      %9 = vector.load %arg2[%c0, %c0_2] : memref<24x128xbf16, #tpu.memory_space<vmem>>, vector<24x128xbf16>
      %c0_3 = arith.constant 0 : index
      %c0_4 = arith.constant 0 : index
      %10 = vector.load %arg3[%c0_3, %c0_4] : memref<24x128xbf16, #tpu.memory_space<vmem>>, vector<24x128xbf16>
      %cst = arith.constant dense<0.000000e+00> : vector<24x24xf32>
      %11 = tpu.matmul %9, %10, %cst {dimension_numbers = #tpu.dot_dimension_numbers<[1], [1], [0], [0], [0, 0, 1, 0], [], []>} : vector<24x128xbf16>, vector<24x128xbf16>, vector<24x24xf32> -> vector<24x24xf32>
      %12 = arith.extf %9 : vector<24x128xbf16> to vector<24x128xf32>
      %13 = arith.mulf %12, %12 : vector<24x128xf32>
      %cst_5 = arith.constant dense<0.000000e+00> : vector<24xf32>
      %14 = vector.multi_reduction <add>, %13, %cst_5 [1] : vector<24x128xf32> to vector<24xf32>
      %15 = vector.shape_cast %14 : vector<24xf32> to vector<24x1xf32>
      %c0_6 = arith.constant 0 : index
      %c0_7 = arith.constant 0 : index
      %16 = vector.load %arg4[%c0_6, %c0_7] : memref<1x24xf32, #tpu.memory_space<vmem>>, vector<1x24xf32>
      %17 = vector.broadcast %15 : vector<24x1xf32> to vector<24x24xf32>
      %18 = vector.broadcast %16 : vector<1x24xf32> to vector<24x24xf32>
      %19 = arith.addf %17, %18 : vector<24x24xf32>
      %cst_8 = arith.constant 2.000000e+00 : f32
      %20 = vector.broadcast %cst_8 : f32 to vector<24x24xf32>
      %21 = arith.mulf %20, %11 : vector<24x24xf32>
      %22 = arith.subf %19, %21 : vector<24x24xf32>
      %cst_9 = arith.constant 0.000000e+00 : f32
      %23 = vector.broadcast %cst_9 : f32 to vector<24x24xf32>
      %24 = arith.maximumf %22, %23 : vector<24x24xf32>
      %c24_i32_10 = arith.constant 24 : i32
      %25 = arith.muli %arg0, %c24_i32_10 : i32
      %26 = tpu.iota {dimensions = array<i32: 0>} : vector<24x24xi32>
      %27 = vector.broadcast %25 : i32 to vector<24x24xi32>
      %28 = arith.addi %27, %26 : vector<24x24xi32>
      %c24_i32_11 = arith.constant 24 : i32
      %29 = arith.muli %arg1, %c24_i32_11 : i32
      %30 = tpu.iota {dimensions = array<i32: 1>} : vector<24x24xi32>
      %31 = vector.broadcast %29 : i32 to vector<24x24xi32>
      %32 = arith.addi %31, %30 : vector<24x24xi32>
      %33 = arith.cmpi slt, %28, %32 : vector<24x24xi32>
      %c20_i32 = arith.constant 20 : i32
      %34 = vector.broadcast %c20_i32 : i32 to vector<24x24xi32>
      %35 = arith.cmpi slt, %32, %34 : vector<24x24xi32>
      %36 = arith.andi %33, %35 : vector<24x24xi1>
      %c0_12 = arith.constant 0 : index
      %c0_13 = arith.constant 0 : index
      %37 = vector.load %arg5[%c0_12, %c0_13] : memref<24x1xi32, #tpu.memory_space<vmem>>, vector<24x1xi32>
      %c0_14 = arith.constant 0 : index
      %c0_15 = arith.constant 0 : index
      %38 = vector.load %arg6[%c0_14, %c0_15] : memref<1x24xi32, #tpu.memory_space<vmem>>, vector<1x24xi32>
      %39 = vector.broadcast %37 : vector<24x1xi32> to vector<24x24xi32>
      %40 = vector.broadcast %38 : vector<1x24xi32> to vector<24x24xi32>
      %41 = arith.cmpi eq, %39, %40 : vector<24x24xi32>
      %42 = arith.andi %36, %41 : vector<24x24xi1>
      %cst_16 = arith.constant 0.000000e+00 : f32
      %43 = vector.broadcast %cst_16 : f32 to vector<24x24xf32>
      %44 = arith.select %42, %24, %43 : vector<24x24xi1>, vector<24x24xf32>
      %45 = math.sqrt %24 : vector<24x24xf32>
      %cst_17 = arith.constant 1.000000e+01 : f32
      %46 = vector.broadcast %cst_17 : f32 to vector<24x24xf32>
      %47 = arith.subf %46, %45 : vector<24x24xf32>
      %cst_18 = arith.constant 0.000000e+00 : f32
      %48 = vector.broadcast %cst_18 : f32 to vector<24x24xf32>
      %49 = arith.maximumf %47, %48 : vector<24x24xf32>
      %cst_19 = arith.constant dense<true> : vector<24x24xi1>
      %50 = arith.xori %41, %cst_19 : vector<24x24xi1>
      %51 = arith.andi %36, %50 : vector<24x24xi1>
      %52 = arith.mulf %49, %49 : vector<24x24xf32>
      %cst_20 = arith.constant 0.000000e+00 : f32
      %53 = vector.broadcast %cst_20 : f32 to vector<24x24xf32>
      %54 = arith.select %51, %52, %53 : vector<24x24xi1>, vector<24x24xf32>
      %55 = arith.addf %44, %54 : vector<24x24xf32>
      %56 = vector.shape_cast %55 : vector<24x24xf32> to vector<1x24x24xf32>
      %cst_21 = arith.constant dense<0.000000e+00> : vector<1xf32>
      %57 = vector.multi_reduction <add>, %56, %cst_21 [1, 2] : vector<1x24x24xf32> to vector<1xf32>
      %58 = vector.shape_cast %57 : vector<1xf32> to vector<1x1x1xf32>
      %59 = vector.extract %58[0, 0, 0] : f32 from vector<1x1x1xf32>
      %60 = vector.broadcast %59 : f32 to vector<8x128xf32>
      %c0_22 = arith.constant 0 : index
      %c0_23 = arith.constant 0 : index
      %61 = vector.load %arg7[%c0_22, %c0_23] : memref<8x128xf32, #tpu.memory_space<vmem>>, vector<8x128xf32>
      tpu.vector_store %arg7[%c0_22, %c0_23], %60 {strides = array<i32>} : memref<8x128xf32, #tpu.memory_space<vmem>>, vector<8x128xf32>,
    } else {
    }
    %true = arith.constant true
    %6 = arith.xori %3, %true : i1
    %7 = arith.extui %6 : i1 to i32
    %c0_i32_1 = arith.constant 0 : i32
    %8 = arith.cmpi ne, %7, %c0_i32_1 : i32
    scf.if %8 {
      %cst = arith.constant 0.000000e+00 : f32
      %9 = vector.broadcast %cst : f32 to vector<8x128xf32>
      %c0 = arith.constant 0 : index
      %c0_2 = arith.constant 0 : index
      %10 = vector.load %arg7[%c0, %c0_2] : memref<8x128xf32, #tpu.memory_space<vmem>>, vector<8x128xf32>
      tpu.vector_store %arg7[%c0, %c0_2], %9 {strides = array<i32>} : memref<8x128xf32, #tpu.memory_space<vmem>>, vector<8x128xf32>,
    } else {
    }
    return
  }
  func.func @transform_0(%arg0: i32, %arg1: i32) -> (i32, i32) {
    %c0_i32 = arith.constant 0 : i32
    %c0_i32_0 = arith.constant 0 : i32
    return %arg0, %c0_i32 : i32, i32
  }
  func.func @transform_1(%arg0: i32, %arg1: i32) -> (i32, i32) {
    %c0_i32 = arith.constant 0 : i32
    %c0_i32_0 = arith.constant 0 : i32
    return %arg1, %c0_i32 : i32, i32
  }
  func.func @transform_2(%arg0: i32, %arg1: i32) -> (i32, i32) {
    %c0_i32 = arith.constant 0 : i32
    %c0_i32_0 = arith.constant 0 : i32
    return %c0_i32, %arg1 : i32, i32
  }
  func.func @transform_3(%arg0: i32, %arg1: i32) -> (i32, i32) {
    %c0_i32 = arith.constant 0 : i32
    %c0_i32_0 = arith.constant 0 : i32
    return %arg0, %c0_i32 : i32, i32
  }
  func.func @transform_4(%arg0: i32, %arg1: i32) -> (i32, i32) {
    %c0_i32 = arith.constant 0 : i32
    %c0_i32_0 = arith.constant 0 : i32
    return %c0_i32, %arg1 : i32, i32
  }
  func.func @transform_5(%arg0: i32, %arg1: i32) -> (i32, i32) {
    %c0_i32 = arith.constant 0 : i32
    return %arg0, %arg1 : i32, i32
  }
}

</mosaic_0001>

<llo_original>
// kernel: tpu_custom_call.1
$region0: #{tpu_custom_call.1}
  #allocation0 [shape = 'u32[]', space=smem, size = 0x4, offset = 0x4, fixed_abs, tag = 'smem constant byte address 0x4 - core index']
  #allocation1 [shape = 'u32[144,128]{1,0:T(1,128)}', space=vmem, size = 0x12000, scoped, tag = 'internal scratch']
  %s0 = inlined_call_operand.vmem [shape: bf16[24,128], index: 0, kind: input, shape index: {}]
  %s1 = inlined_call_operand.vmem [shape: bf16[24,128], index: 1, kind: input, shape index: {}]
  %s2 = inlined_call_operand.vmem [shape: f32[1,24], index: 2, kind: input, shape index: {}]
  %s3 = inlined_call_operand.vmem [shape: s32[24,1], index: 3, kind: input, shape index: {}]
  %s4 = inlined_call_operand.vmem [shape: s32[1,24], index: 4, kind: input, shape index: {}]
  %s5 = inlined_call_operand.hbm [shape: f32[8,128], index: 5, kind: output, shape index: {}]
  %s6 = sld [smem:[#allocation0]]
  $region38: #{tpu_custom_call.1} parent=0
    _
  %s8 = ssub.s32 1, %s6
  %s9 = scalar_select 0, %s8, %s6
  $region1: #{tpu_custom_call.1} parent=0
    #allocation2 [shape = 'u8[4096]{0}', space=vmem, size = 0x1000, scoped, tag = 'output window, operand 0, single buffered']
    #allocation3 [shape = 's32[1]{0}', space=sflag, size = 0x4, scoped, tag = 'scoped memory for tpu_custom_call.1']
    %10 = vsyncpa [#allocation3], 0
    // Predicated region
    $region2: #{tpu_custom_call.1} parent=1 // pred_check
      _
    $region3: #{tpu_custom_call.1} parent=1 // pred_check_branch
      %12 = sbr.rel (0) target = $region5
    $region4: #{tpu_custom_call.1} parent=1 // pred_region
      _
    $region5: #{tpu_custom_call.1} parent=1 // pred_fallthru
      _
    // Predicated region
    $region6: #{tpu_custom_call.1} parent=1 // pred_check
      _
    $region7: #{tpu_custom_call.1} parent=1 // pred_check_branch
      %14 = sbr.rel (0) target = $region9
    $region8: #{tpu_custom_call.1} parent=1 // pred_region
      _
    $region9: #{tpu_custom_call.1} parent=1 // pred_fallthru
      _
    // Predicated region
    $region10: #{tpu_custom_call.1} parent=1 // pred_check
      _
    $region11: #{tpu_custom_call.1} parent=1 // pred_check_branch
      %16 = sbr.rel (0) target = $region13
    $region12: #{tpu_custom_call.1} parent=1 // pred_region
      _
    $region13: #{tpu_custom_call.1} parent=1 // pred_fallthru
      _
    // Predicated region
    $region14: #{tpu_custom_call.1} parent=1 // pred_check
      _
    $region15: #{tpu_custom_call.1} parent=1 // pred_check_branch
      %18 = sbr.rel (0) target = $region17
    $region16: #{tpu_custom_call.1} parent=1 // pred_region
      _
    $region17: #{tpu_custom_call.1} parent=1 // pred_fallthru
      _
    // Predicated region
    $region18: #{tpu_custom_call.1} parent=1 // pred_check
      _
    $region19: #{tpu_custom_call.1} parent=1 // pred_check_branch
      %20 = sbr.rel (0) target = $region21
    $region20: #{tpu_custom_call.1} parent=1 // pred_region
      _
    $region21: #{tpu_custom_call.1} parent=1 // pred_fallthru
      _
    %s22 = smul.u32 0, 24
    %s23 = sadd.s32 0, 1
    %s24 = smul.u32 %s23, 24
    %p25 = scmp.lt.s32.totalorder %s22, %s24
    // Predicated region
    $region22: #{tpu_custom_call.1} parent=1 // pred_check
      %p26 = pneg %p25
    $region23: #{tpu_custom_call.1} parent=1 // pred_check_branch
      %28 = sbr.rel (%p26) target = $region25
    $region24: #{tpu_custom_call.1} parent=1 // pred_region
      %v29 = vld [vmem:[%s0] sm:$0xf]
      %v30 = vld [vmem:[%s0 + $0x4] sm:$0xf]
      %v31 = vld [vmem:[%s0 + $0x8] sm:$0xf]
      %v32 = vld [vmem:[%s1] sm:$0xf]
      %v33 = vld [vmem:[%s1 + $0x4] sm:$0xf]
      %v34 = vld [vmem:[%s1 + $0x8] sm:$0xf]
      %v38 = vunpack.c.l.b16 %v29
      %v39 = vunpack.c.l.b16 %v30
      %v40 = vunpack.c.l.b16 %v31
      %v41 = vpack.c.b16 %v39, %v38
      %v42 = vpack.c.b16 %v40, %v40
      %v48 = vunpack.c.l.b16 %v32
      %v49 = vunpack.c.l.b16 %v33
      %v50 = vunpack.c.l.b16 %v34
      %v51 = vpack.c.b16 %v49, %v48
      %v52 = vpack.c.b16 %v50, %v50
      %55 = vmatprep.subr.bf16.mxu0 0
      %56 = vmatpush1.bf16.xpose.msra.mxu0 0
      %57 = vmatprep.subr.bf16.mxu0 0
      %58 = vmatpush1.bf16.xpose.msra.mxu0 0
      %59 = vmatprep.subr.bf16.mxu0 0
      %60 = vmatpush1.bf16.xpose.msra.mxu0 0
      %61 = vmatprep.subr.bf16.mxu0 0
      %62 = vmatpush1.bf16.xpose.msra.mxu0 0
      %63 = vmatprep.subr.bf16.mxu0 0
      %64 = vmatpush1.bf16.xpose.msra.mxu0 0
      %65 = vmatprep.subr.bf16.mxu0 0
      %66 = vmatpush1.bf16.xpose.msra.mxu0 0
      %67 = vmatprep.subr.bf16.mxu0 0
      %68 = vmatpush1.bf16.xpose.msra.mxu0 %v52
      %69 = vmatprep.subr.bf16.mxu0 0
      %70 = vmatpush1.bf16.xpose.msra.mxu0 %v51
      %71 = vmatprep.subr.bf16.mxu0 0
      %72 = vmatpush2.bf16.xpose.msra.mxu0 0
      %73 = vmatprep.subr.bf16.mxu0 0
      %74 = vmatpush2.bf16.xpose.msra.mxu0 0
      %75 = vmatprep.subr.bf16.mxu0 0
      %76 = vmatpush2.bf16.xpose.msra.mxu0 0
      %77 = vmatprep.subr.bf16.mxu0 0
      %78 = vmatpush2.bf16.xpose.msra.mxu0 0
      %79 = vmatprep.subr.bf16.mxu0 0
      %80 = vmatpush2.bf16.xpose.msra.mxu0 0
      %81 = vmatprep.subr.bf16.mxu0 0
      %82 = vmatpush2.bf16.xpose.msra.mxu0 0
      %83 = vmatprep.subr.bf16.mxu0 0
      %84 = vmatpush2.bf16.xpose.msra.mxu0 0
      %85 = vmatprep.subr.bf16.mxu0 0
      %86 = vmatpush2.bf16.xpose.msra.mxu0 0
      %87 = vmatprep.mubr.bf16.mxu0 0
      %88 = vmatmul.mubr.bf16.gmra.mxu0 %v41
      %v89 = vpop.f32.mrf.mxu0
      %v90 = vadd.f32 0.0, %v89
      %v91 = vpop.f32.mrf.mxu0
      %v92 = vpop.f32.mrf.mxu0
      %v93 = vadd.f32 0.0, %v92
      %v94 = vpop.f32.mrf.mxu0
      %95 = vmatprep.mubr.bf16.mxu0 0
      %96 = vmatmul.mubr.bf16.gmra.mxu0 %v42
      %v97 = vpop.f32.mrf.mxu0
      %v98 = vadd.f32 0.0, %v97
      %v99 = vpop.f32.mrf.mxu0
      %v100 = vpop.f32.mrf.mxu0
      %v101 = vpop.f32.mrf.mxu0
      %102 = vdwg.mxu0
      %v103 = vunpack.c.l.bf16 %v29
      %v104 = vunpack.c.l.bf16 %v30
      %v105 = vunpack.c.l.bf16 %v31
      %v106 = vmul.f32 %v103, %v103
      %v107 = vmul.f32 %v104, %v104
      %v108 = vmul.f32 %v105, %v105
      %109 = vadd.xlane.f32.xlu0 %v106
      %v110 = vpop.xlane.xlu0 %109
      %111 = vadd.xlane.f32.xlu0 %v107
      %v112 = vpop.xlane.xlu0 %111
      %113 = vadd.xlane.f32.xlu0 %v108
      %v114 = vpop.xlane.xlu0 %113
      %v115 = vld [vmem:[%s2] sm:$0x1]
      %v117 = vlaneseq
      %v118 = vshrl.u32 %v117, 7
      %v119 = vsub.s32 0, %v118
      %v120 = vrot.slane %v115, %v119
      %v122 = vadd.f32 %v110, %v120
      %v123 = vadd.f32 %v112, %v120
      %v124 = vadd.f32 %v114, %v120
      %v125 = vmul.f32 %v90, 2.0
      %v126 = vmul.f32 %v93, 2.0
      %v127 = vmul.f32 %v98, 2.0
      %v128 = vsub.f32 %v122, %v125
      %v129 = vsub.f32 %v123, %v126
      %v130 = vsub.f32 %v124, %v127
      %v131 = vmax.f32 %v128, 0.0
      %v132 = vmax.f32 %v129, 0.0
      %v133 = vmax.f32 %v130, 0.0
      %v134 = vlaneseq
      %v135 = vshrl.u32 %v134, 7
      %v136 = vadd.s32 %v135, 8
      %v137 = vadd.s32 %v135, 16
      %v138 = vstv %s22
      %v139 = vadd.s32 %v138, %v135
      %v140 = vadd.s32 %v138, %v136
      %v141 = vadd.s32 %v138, %v137
      %s142 = smul.u32 0, 24
      %v143 = vlaneseq
      %v144 = vand.u32 %v143, 127
      %v145 = vstv %s142
      %v146 = vadd.s32 %v145, %v144
      %vm147 = vcmp.lt.s32.totalorder %v139, %v146
      %vm148 = vcmp.lt.s32.totalorder %v140, %v146
      %vm149 = vcmp.lt.s32.totalorder %v141, %v146
      %vm150 = vcmp.lt.s32.totalorder %v146, 20
      %vm151 = vmand %vm147, %vm150
      %vm152 = vmand %vm148, %vm150
      %vm153 = vmand %vm149, %vm150
      %v154 = vld [vmem:[%s3] sm:$0xff]
      %v155 = vld [vmem:[%s3 + $0x8] sm:$0xff]
      %v156 = vld [vmem:[%s3 + $0x10] sm:$0xff]
      %v157 = vld [vmem:[%s4] sm:$0x1]
      %158 = vset.pattern.permute.xlu0 0
      %159 = vperm.xlu0 %158, %v154
      %v160 = vpop.permute.xlu0 %159
      %161 = vset.pattern.permute.xlu0 0
      %162 = vperm.xlu0 %161, %v155
      %v163 = vpop.permute.xlu0 %162
      %164 = vset.pattern.permute.xlu0 0
      %165 = vperm.xlu0 %164, %v156
      %v166 = vpop.permute.xlu0 %165
      %v167 = vlaneseq
      %v168 = vshrl.u32 %v167, 7
      %v169 = vsub.s32 0, %v168
      %v170 = vrot.slane %v157, %v169
      %vm171 = vcmp.eq.s32.totalorder %v160, %v170
      %vm172 = vcmp.eq.s32.totalorder %v163, %v170
      %vm173 = vcmp.eq.s32.totalorder %v166, %v170
      %vm174 = vmand %vm151, %vm171
      %vm175 = vmand %vm152, %vm172
      %vm176 = vmand %vm153, %vm173
      %v177 = vsel %vm174, %v131, 0.0
      %v178 = vsel %vm175, %v132, 0.0
      %v179 = vsel %vm176, %v133, 0.0
      %v180 = vrsqrt.pop %v131
      %v181 = vmul.f32 %v131, %v180
      %vm182 = vcmp.eq.f32.partialorder %v131, inf
      %v183 = vsel %vm182, %v131, %v181
      %vm184 = vcmp.eq.f32.partialorder %v131, 0.0
      %v185 = vand.u32 %v131, 2147483648
      %v186 = vsel %vm184, %v185, %v183
      %v187 = vrsqrt.pop %v132
      %v188 = vmul.f32 %v132, %v187
      %vm189 = vcmp.eq.f32.partialorder %v132, inf
      %v190 = vsel %vm189, %v132, %v188
      %vm191 = vcmp.eq.f32.partialorder %v132, 0.0
      %v192 = vand.u32 %v132, 2147483648
      %v193 = vsel %vm191, %v192, %v190
      %v194 = vrsqrt.pop %v133
      %v195 = vmul.f32 %v133, %v194
      %vm196 = vcmp.eq.f32.partialorder %v133, inf
      %v197 = vsel %vm196, %v133, %v195
      %vm198 = vcmp.eq.f32.partialorder %v133, 0.0
      %v199 = vand.u32 %v133, 2147483648
      %v200 = vsel %vm198, %v199, %v197
      %v201 = vsub.f32 10.0, %v186
      %v202 = vsub.f32 10.0, %v193
      %v203 = vsub.f32 10.0, %v200
      %v204 = vmax.f32 %v201, 0.0
      %v205 = vmax.f32 %v202, 0.0
      %v206 = vmax.f32 %v203, 0.0
      %vm207 = vmxor %vm171, 1
      %vm208 = vmxor %vm172, 1
      %vm209 = vmxor %vm173, 1
      %vm210 = vmand %vm151, %vm207
      %vm211 = vmand %vm152, %vm208
      %vm212 = vmand %vm153, %vm209
      %v213 = vmul.f32 %v204, %v204
      %v214 = vmul.f32 %v205, %v205
      %v215 = vmul.f32 %v206, %v206
      %v216 = vsel %vm210, %v213, 0.0
      %v217 = vsel %vm211, %v214, 0.0
      %v218 = vsel %vm212, %v215, 0.0
      %v219 = vadd.f32 %v177, %v216
      %v220 = vadd.f32 %v178, %v217
      %v221 = vadd.f32 %v179, %v218
      %vm222 = vcmask 195584
      %v223 = vsel %vm222, %v219, 0.0
      %v224 = vsel %vm222, %v220, 0.0
      %v225 = vadd.f32 %v223, %v224
      %v226 = vsel %vm222, %v221, 0.0
      %v227 = vadd.f32 %v225, %v226
      %228 = vadd.xlane.f32.xlu0 %v227
      %v229 = vpop.xlane.xlu0 %228
      %v230 = vrot.slane %v229, 4
      %v231 = vadd.f32 %v229, %v230
      %v232 = vrot.slane %v231, 2
      %v233 = vadd.f32 %v231, %v232
      %v234 = vrot.slane %v233, 1
      %v235 = vadd.f32 %v233, %v234
      %s236 = vtos %v235
      %v237 = vstv %s236
      %238 = vst [vmem:[#allocation2] sm:$0xff] %v237
    $region25: #{tpu_custom_call.1} parent=1 // pred_fallthru
      _
    %p239 = scmp.ge.s32.totalorder %s22, %s24
    // Predicated region
    $region26: #{tpu_custom_call.1} parent=1 // pred_check
      %p240 = pneg %p239
    $region27: #{tpu_custom_call.1} parent=1 // pred_check_branch
      %242 = sbr.rel (%p240) target = $region29
    $region28: #{tpu_custom_call.1} parent=1 // pred_region
      %243 = vst [vmem:[#allocation2] sm:$0xff] 0.0
    $region29: #{tpu_custom_call.1} parent=1 // pred_fallthru
      _
    // Predicated region
    $region30: #{tpu_custom_call.1} parent=1 // pred_check
      _
    $region31: #{tpu_custom_call.1} parent=1 // pred_check_branch
      %245 = sbr.rel (0) target = $region33
    $region32: #{tpu_custom_call.1} parent=1 // pred_region
      %s247 = ssub.s32 128, 128
      %248 = vsyncadd [#allocation3], %s247
      %s250 = sshll.u32 [#allocation2], 4
      %s251 = int_to_ptr.vmem [resolvable:$true] %s250
      %253 = dma.vmem_to_hbm [thread:$0]  %s251, 128, %s5, [#allocation3]
    $region33: #{tpu_custom_call.1} parent=1 // pred_fallthru
      _
    // Predicated region
    $region34: #{tpu_custom_call.1} parent=1 // pred_check
      _
    $region35: #{tpu_custom_call.1} parent=1 // pred_check_branch
      %255 = sbr.rel (0) target = $region37
    $region36: #{tpu_custom_call.1} parent=1 // pred_region
      %256 = dma.done [#allocation3], 128
    $region37: #{tpu_custom_call.1} parent=1 // pred_fallthru
      _
    %257 = vsyncpa [#allocation3], 1

</llo_original>
